<compile_context>
chip_gen: v7x
topology: tpu7x:2x2x1
jax: 0.10.0
libtpu: 0.0.40
codegen_flags: <defaults>
</compile_context>

<pallas_src>
from functools import partial

import jax
import jax.numpy as jnp
from jax.experimental import pallas as pl
from jax.experimental.pallas import tpu as pltpu


def _layernorm_kernel(x_ref, g_ref, o_ref, *, eps):
    # x_ref: (1, C, TS) tile of the flattened input
    # g_ref: (1, C, 1)  gamma, kept in f32, broadcast over batch & spatial
    x = x_ref[...].astype(jnp.float32)
    g = g_ref[...]
    mean = jnp.mean(x, axis=1, keepdims=True)                 # reduce over channels
    diff = x - mean
    var = jnp.mean(diff * diff, axis=1, keepdims=True)        # unbiased=False
    y = diff * jax.lax.rsqrt(var + eps) * g
    o_ref[...] = y.astype(o_ref.dtype)


def _choose_spatial_tile(S, C, itemsize):
    """Pick a lane-axis tile TS (multiple of 128) targeting ~2 MiB per x tile.

    2 MiB per tile keeps the double-buffered in+out footprint well under the
    32 MiB scoped VMEM limit on every generation (v5e/v6e/v7x) while being big
    enough to amortize the ~0.35 us per-grid-step overhead of this mem-bound op.
    """
    LANE = 128
    s128 = pl.cdiv(S, LANE) * LANE
    target_bytes = 2 << 20
    ts = max(LANE, (target_bytes // max(1, C * itemsize)) // LANE * LANE)
    # Keep a few grid steps so the parallel spatial axis can feed both
    # TensorCores on v7x instead of collapsing to a single block per batch.
    min_blocks = min(4, s128 // LANE)
    ts = min(ts, max(LANE, (s128 // min_blocks) // LANE * LANE))
    ts = min(ts, s128)
    s_pad = pl.cdiv(s128, ts) * ts
    return ts, s_pad


def layer_norm(x, gamma):
    """Pallas TPU channel LayerNorm matching the PyTorch module.

    x:     (N, C, D, H, W)  -- NCDHW, same as the PyTorch module
    gamma: (C,)             -- the torch (1, C, 1, 1, 1) parameter squeezed
    """
    N, C, D, H, W = x.shape
    S = D * H * W
    eps = 1e-05 if x.dtype == jnp.float32 else 1e-03   # matches the torch module
    itemsize = jnp.dtype(x.dtype).itemsize

    TS, Spad = _choose_spatial_tile(S, C, itemsize)

    x3 = x.reshape(N, C, S)
    if Spad != S:
        # Zero-pad the flattened spatial axis: keeps stores lane-dense and
        # unmasked. Padded columns normalize to exactly 0 and are sliced off.
        x3 = jnp.pad(x3, ((0, 0), (0, 0), (0, Spad - S)))
    g3 = gamma.reshape(1, C, 1).astype(jnp.float32)     # keep gamma full precision

    grid = (N, Spad // TS)

    cost = pl.CostEstimate(
        flops=7 * N * C * Spad,
        transcendentals=N * Spad,
        bytes_accessed=2 * N * C * Spad * itemsize + C * 4,
    )

    out3 = pl.pallas_call(
        partial(_layernorm_kernel, eps=eps),
        out_shape=jax.ShapeDtypeStruct((N, C, Spad), x.dtype),
        grid_spec=pltpu.PrefetchScalarGridSpec(
            num_scalar_prefetch=0,
            grid=grid,
            in_specs=[
                pl.BlockSpec((1, C, TS), lambda n, s: (n, 0, s)),
                pl.BlockSpec((1, C, 1), lambda n, s: (0, 0, 0)),
            ],
            out_specs=pl.BlockSpec((1, C, TS), lambda n, s: (n, 0, s)),
        ),
        compiler_params=pltpu.CompilerParams(
            dimension_semantics=("parallel", "parallel"),
            # Raise v5e's 16 MiB default; equals the v6e/v7x default and stays
            # safely below v7x's 64 MiB physical VMEM. Actual footprint here is
            # ~4 tiles (~8 MiB) + f32 intermediates, far under this limit.
            vmem_limit_bytes=32 << 20,
        ),
        cost_estimate=cost,
    )(x3, g3)

    if Spad != S:
        out3 = out3[:, :, :S]
    return out3.reshape(N, C, D, H, W)


def _reference(x, gamma):
    eps = 1e-05 if x.dtype == jnp.float32 else 1e-03
    xf = x.astype(jnp.float32)
    mean = jnp.mean(xf, axis=1, keepdims=True)
    var = jnp.mean((xf - mean) ** 2, axis=1, keepdims=True)
    g = gamma.reshape(1, -1, 1, 1, 1).astype(jnp.float32)
    return ((xf - mean) / jnp.sqrt(var + eps) * g).astype(x.dtype)


if __name__ == "__main__":
    key = jax.random.PRNGKey(0)

    # Case 1: small 5-D video-shaped input, S a multiple of 128.
    N, C, D, H, W = 2, 4, 4, 8, 8
    k1, k2 = jax.random.split(key)
    x = jax.random.normal(k1, (N, C, D, H, W), dtype=jnp.float32)
    gamma = jnp.ones((C,), dtype=jnp.float32)  # nn.Parameter(torch.ones(1,dim,1,1,1))

    out = jax.block_until_ready(layer_norm(x, gamma))
    ref = _reference(x, gamma)
    assert out.shape == x.shape and out.dtype == x.dtype
    assert jnp.allclose(out, ref, atol=1e-5, rtol=1e-5)

    # Case 2: S not a multiple of 128 -> exercises the zero-padding path.
    N2, C2, D2, H2, W2 = 1, 8, 3, 5, 7
    x2 = jax.random.normal(k2, (N2, C2, D2, H2, W2), dtype=jnp.float32)
    gamma2 = jax.random.normal(key, (C2,), dtype=jnp.float32) * 0.1 + 1.0
    out2 = jax.block_until_ready(layer_norm(x2, gamma2))
    ref2 = _reference(x2, gamma2)
    assert out2.shape == x2.shape and out2.dtype == x2.dtype
    assert jnp.allclose(out2, ref2, atol=1e-5, rtol=1e-5)

    print("KERNEL_OK")
</pallas_src>

<mosaic_0001>
module attributes {stable_mosaic.version = 11 : i64} {
  func.func @_layernorm_kernel(%arg0: i32, %arg1: i32, %arg2: memref<1x4x128xf32, #tpu.memory_space<vmem>>, %arg3: memref<1x4x1xf32, #tpu.memory_space<vmem>>, %arg4: memref<1x4x128xf32, #tpu.memory_space<vmem>>) attributes {dimension_semantics = [#tpu.dimension_semantics<parallel>, #tpu.dimension_semantics<parallel>], iteration_bounds = array<i64: 2, 2>, scalar_prefetch = 0 : i64, scratch_operands = 0 : i64, tpu.core_type = #tpu.core_type<tc>, window_params = [{transform_indices = @transform_0, window_bounds = array<i64: 1, 4, 128>}, {pipeline_mode = #tpu.pipeline_mode<synchronous>, transform_indices = @transform_1, window_bounds = array<i64: 1, 4, 1>}, {transform_indices = @transform_2, window_bounds = array<i64: 1, 4, 128>}]} {
    %c0 = arith.constant 0 : index
    %c0_0 = arith.constant 0 : index
    %c0_1 = arith.constant 0 : index
    %0 = vector.load %arg2[%c0, %c0_0, %c0_1] : memref<1x4x128xf32, #tpu.memory_space<vmem>>, vector<1x4x128xf32>
    %c0_2 = arith.constant 0 : index
    %c0_3 = arith.constant 0 : index
    %c0_4 = arith.constant 0 : index
    %1 = vector.load %arg3[%c0_2, %c0_3, %c0_4] : memref<1x4x1xf32, #tpu.memory_space<vmem>>, vector<1x4x1xf32>
    %cst = arith.constant dense<0.000000e+00> : vector<1x128xf32>
    %2 = vector.multi_reduction <add>, %0, %cst [1] : vector<1x4x128xf32> to vector<1x128xf32>
    %3 = vector.shape_cast %2 : vector<1x128xf32> to vector<1x1x128xf32>
    %cst_5 = arith.constant 4.000000e+00 : f32
    %4 = vector.broadcast %cst_5 : f32 to vector<1x1x128xf32>
    %5 = arith.divf %3, %4 : vector<1x1x128xf32>
    %6 = vector.broadcast %5 : vector<1x1x128xf32> to vector<1x4x128xf32>
    %7 = arith.subf %0, %6 : vector<1x4x128xf32>
    %8 = arith.mulf %7, %7 : vector<1x4x128xf32>
    %cst_6 = arith.constant dense<0.000000e+00> : vector<1x128xf32>
    %9 = vector.multi_reduction <add>, %8, %cst_6 [1] : vector<1x4x128xf32> to vector<1x128xf32>
    %10 = vector.shape_cast %9 : vector<1x128xf32> to vector<1x1x128xf32>
    %cst_7 = arith.constant 4.000000e+00 : f32
    %11 = vector.broadcast %cst_7 : f32 to vector<1x1x128xf32>
    %12 = arith.divf %10, %11 : vector<1x1x128xf32>
    %cst_8 = arith.constant 9.99999974E-6 : f32
    %13 = vector.broadcast %cst_8 : f32 to vector<1x1x128xf32>
    %14 = arith.addf %12, %13 : vector<1x1x128xf32>
    %15 = math.rsqrt %14 : vector<1x1x128xf32>
    %16 = vector.broadcast %15 : vector<1x1x128xf32> to vector<1x4x128xf32>
    %17 = arith.mulf %7, %16 : vector<1x4x128xf32>
    %18 = vector.broadcast %1 : vector<1x4x1xf32> to vector<1x4x128xf32>
    %19 = arith.mulf %17, %18 : vector<1x4x128xf32>
    %c0_9 = arith.constant 0 : index
    %c0_10 = arith.constant 0 : index
    %c0_11 = arith.constant 0 : index
    %20 = vector.load %arg4[%c0_9, %c0_10, %c0_11] : memref<1x4x128xf32, #tpu.memory_space<vmem>>, vector<1x4x128xf32>
    tpu.vector_store %arg4[%c0_9, %c0_10, %c0_11], %19 {strides = array<i32>} : memref<1x4x128xf32, #tpu.memory_space<vmem>>, vector<1x4x128xf32>,
    return
  }
  func.func @transform_0(%arg0: i32, %arg1: i32) -> (i32, i32, i32) {
    %c0_i32 = arith.constant 0 : i32
    %c0_i32_0 = arith.constant 0 : i32
    return %arg0, %c0_i32, %arg1 : i32, i32, i32
  }
  func.func @transform_1(%arg0: i32, %arg1: i32) -> (i32, i32, i32) {
    %c0_i32 = arith.constant 0 : i32
    %c0_i32_0 = arith.constant 0 : i32
    %c0_i32_1 = arith.constant 0 : i32
    %c0_i32_2 = arith.constant 0 : i32
    return %c0_i32, %c0_i32_0, %c0_i32_1 : i32, i32, i32
  }
  func.func @transform_2(%arg0: i32, %arg1: i32) -> (i32, i32, i32) {
    %c0_i32 = arith.constant 0 : i32
    %c0_i32_0 = arith.constant 0 : i32
    return %arg0, %c0_i32, %arg1 : i32, i32, i32
  }
}

</mosaic_0001>

<llo_original>
// kernel: tpu_custom_call.1
$region0: #{tpu_custom_call.1}
  #allocation0 [shape = 'u32[]', space=smem, size = 0x4, offset = 0x4, fixed_abs, tag = 'smem constant byte address 0x4 - core index']
  #allocation1 [shape = 'u32[144,128]{1,0:T(1,128)}', space=vmem, size = 0x12000, scoped, tag = 'internal scratch']
  %s0 = inlined_call_operand.hbm [shape: f32[2,4,256], index: 0, kind: input, shape index: {}]
  %s1 = inlined_call_operand.vmem [shape: f32[1,4,1], index: 1, kind: input, shape index: {}]
  %s2 = inlined_call_operand.hbm [shape: f32[2,4,256], index: 2, kind: output, shape index: {}]
  %s3 = sld [smem:[#allocation0]]
  $region45: #{tpu_custom_call.1} parent=0
    _
  %s5 = ssub.s32 1, %s3
  %s6 = scalar_select 0, %s5, %s3
  $region1: #{tpu_custom_call.1} parent=0
    #allocation2 [shape = 'u8[4096]{0}', space=vmem, size = 0x1000, scoped, tag = 'input window, operand 0']
    #allocation3 [shape = 's32[2]{0}', space=sflag, size = 0x8, scoped, tag = 'scoped memory for tpu_custom_call.1']
    #allocation4 [shape = 's32[2]{0}', space=sflag, size = 0x8, scoped, tag = 'scoped memory for tpu_custom_call.1']
    #allocation5 [shape = 'u8[4096]{0}', space=vmem, size = 0x1000, scoped, tag = 'output window, operand 0']
    %7 = vsyncpa [#allocation3], 0
    %s8 = scalar_lea.sflag [#allocation3], 1
    %9 = vsyncpa %s8, 0
    %10 = vsyncpa [#allocation4], 0
    %s11 = scalar_lea.sflag [#allocation4], 1
    %12 = vsyncpa %s11, 0
    loop: start=0, step=1, limit=6
    $region2: #{tpu_custom_call.1} parent=1 // loop_pre_header
      _
    $region3: #{tpu_custom_call.1} parent=1 // loop_header
      %s14 = sphi 0, %s18
      %p15 = scmp.ge.s32.totalorder %s14, 6
      %s21 = sphi 0, %s33
      %s22 = sphi 0, %s29
      %s23 = sphi 0, %s21
      %s24 = sphi 0, %s22
      %s25 = sphi 0, %s23
      %s26 = sphi 0, %s24
      %s38 = sphi 0, %s40
      %s41 = sphi 0, %s38
      %s42 = sphi 0, %s41
      %s58 = sphi 0, %s42
      %s62 = sphi 0, %s62
      %s64 = sphi 0, %s62
      %s65 = sphi 0, %s64
      %s79 = sphi 0, %s65
      %s87 = sphi 0, %s89
      %s90 = sphi 0, %s87
      %s91 = sphi 0, %s90
      %s107 = sphi 0, %s91
    $region4: #{tpu_custom_call.1} parent=1 // loop_header_branch
      %17 = sbr.rel (%p15) target = $region8
    $region5: #{tpu_custom_call.1} parent=1 // loop_body
      %s19 = ssub.s32 %s14, 1
      %s20 = ssub.s32 %s14, 2
      %s27 = sadd.s32 1, %s22
      %p28 = scmp.ge.s32.totalorder %s27, 2
      %s29 = scalar_select %p28, 0, %s27
      %s30 = sadd.s32 1, %s21
      %s31 = scalar_select %p28, %s30, %s21
      %p32 = scmp.ge.s32.totalorder %s31, 2
      %s33 = scalar_select %p32, 0, %s31
      %s34 = ssub.s32 %s21, %s33
      %s35 = ssub.s32 %s22, %s29
      %s36 = sor.u32 %s34, %s35
      %p37 = scmp.eq.s32.totalorder %s36, 0
      %s39 = sadd.s32 %s38, 1
      %s40 = scalar_select %p37, %s38, %s39
      %p43 = pneg %p37
      %p44 = scmp.eq.s32.totalorder %s14, 3
      %p45 = por %p43, %p44
      %p46 = scmp.ne.s32.totalorder %s38, %s41
      %p47 = scmp.eq.s32.totalorder %s14, 0
      %p48 = por %p46, %p47
      %p49 = scmp.ne.s32.totalorder %s38, %s41
      %p50 = scmp.eq.s32.totalorder %s19, 3
      %p51 = por %p49, %p50
      %p52 = scmp.ne.s32.totalorder %s41, %s42
      %p53 = scmp.eq.s32.totalorder %s19, 0
      %p54 = por %p52, %p53
      %p55 = scmp.ne.s32.totalorder %s41, %s42
      %p56 = scmp.eq.s32.totalorder %s20, 3
      %p57 = por %p55, %p56
      %p59 = scmp.ne.s32.totalorder %s42, %s58
      %p60 = scmp.eq.s32.totalorder %s20, 0
      %p61 = por %p59, %p60
      %s63 = sadd.s32 %s62, 1
      %p66 = scmp.eq.s32.totalorder %s14, 3
      %p67 = scmp.ne.s32.totalorder %s62, %s64
      %p68 = scmp.eq.s32.totalorder %s14, 0
      %p69 = por %p67, %p68
      %p70 = scmp.ne.s32.totalorder %s62, %s64
      %p71 = scmp.eq.s32.totalorder %s19, 3
      %p72 = por %p70, %p71
      %p73 = scmp.ne.s32.totalorder %s64, %s65
      %p74 = scmp.eq.s32.totalorder %s19, 0
      %p75 = por %p73, %p74
      %p76 = scmp.ne.s32.totalorder %s64, %s65
      %p77 = scmp.eq.s32.totalorder %s20, 3
      %p78 = por %p76, %p77
      %p80 = scmp.ne.s32.totalorder %s65, %s79
      %p81 = scmp.eq.s32.totalorder %s20, 0
      %p82 = por %p80, %p81
      %s83 = ssub.s32 %s21, %s33
      %s84 = ssub.s32 %s22, %s29
      %s85 = sor.u32 %s83, %s84
      %p86 = scmp.eq.s32.totalorder %s85, 0
      %s88 = sadd.s32 %s87, 1
      %s89 = scalar_select %p86, %s87, %s88
      %p92 = pneg %p86
      %p93 = scmp.eq.s32.totalorder %s14, 3
      %p94 = por %p92, %p93
      %p95 = scmp.ne.s32.totalorder %s87, %s90
      %p96 = scmp.eq.s32.totalorder %s14, 0
      %p97 = por %p95, %p96
      %p98 = scmp.ne.s32.totalorder %s87, %s90
      %p99 = scmp.eq.s32.totalorder %s19, 3
      %p100 = por %p98, %p99
      %p101 = scmp.ne.s32.totalorder %s90, %s91
      %p102 = scmp.eq.s32.totalorder %s19, 0
      %p103 = por %p101, %p102
      %p104 = scmp.ne.s32.totalorder %s90, %s91
      %p105 = scmp.eq.s32.totalorder %s20, 3
      %p106 = por %p104, %p105
      %p108 = scmp.ne.s32.totalorder %s91, %s107
      %p109 = scmp.eq.s32.totalorder %s20, 0
      %p110 = por %p108, %p109
      %p111 = scmp.le.s32.totalorder 1, %s14
      %p112 = scmp.lt.s32.totalorder %s14, 5
      %p113 = pnand %p111, %p112
      %p114 = pneg %p113
      // Predicated region
      $region9: #{tpu_custom_call.1} parent=5 // pred_check
        _
      $region10: #{tpu_custom_call.1} parent=5 // pred_check_branch
        %116 = sbr.rel (%p113) target = $region12
      $region11: #{tpu_custom_call.1} parent=5 // pred_region
        %s117 = ssub.s32 %s14, 1
        // Predicated region
        $region13: #{tpu_custom_call.1} parent=11 // pred_check
          %p118 = pneg %p75
        $region14: #{tpu_custom_call.1} parent=11 // pred_check_branch
          %120 = sbr.rel (%p118) target = $region16
        $region15: #{tpu_custom_call.1} parent=11 // pred_region
          _
        $region16: #{tpu_custom_call.1} parent=11 // pred_fallthru
          _
      $region12: #{tpu_custom_call.1} parent=5 // pred_fallthru
        _
      %p121 = scmp.lt.s32.totalorder %s14, 4
      // Predicated region
      $region17: #{tpu_custom_call.1} parent=5 // pred_check
        %p122 = pneg %p121
      $region18: #{tpu_custom_call.1} parent=5 // pred_check_branch
        %124 = sbr.rel (%p122) target = $region20
      $region19: #{tpu_custom_call.1} parent=5 // pred_region
        // Predicated region
        $region21: #{tpu_custom_call.1} parent=19 // pred_check
          %p125 = pneg %p48
        $region22: #{tpu_custom_call.1} parent=19 // pred_check_branch
          %127 = sbr.rel (%p125) target = $region24
        $region23: #{tpu_custom_call.1} parent=19 // pred_region
          %s128 = sand.u32 %s38, 1
          %s129 = scalar_lea.sflag [#allocation3], %s128
          %s130 = sand.u32 %s38, 1
          %s131 = smul.addr %s130, 4
          %s132 = scalar_lea.vmem [#allocation2], %s131
          %s134 = ssub.s32 64, 64
          %135 = vsyncadd %s129, %s134
          %s136 = smul.addr %s21, 2
          %s137 = sadd.s32 %s22, %s136
          %s138 = smul.addr %s137, 64
          %s139 = scalar_lea.hbm %s0, %s138
          %s141 = sshll.u32 %s132, 4
          %s142 = int_to_ptr.vmem [resolvable:$true] %s141
          %144 = dma.hbm_to_vmem [thread:$0]  %s139, 64, %s142, %s129
        $region24: #{tpu_custom_call.1} parent=19 // pred_fallthru
          _
      $region20: #{tpu_custom_call.1} parent=5 // pred_fallthru
        _
      %p145 = scmp.le.s32.totalorder 1, %s14
      %p146 = scmp.lt.s32.totalorder %s14, 5
      %p147 = pnand %p145, %p146
      %p148 = pneg %p147
      // Predicated region
      $region25: #{tpu_custom_call.1} parent=5 // pred_check
        _
      $region26: #{tpu_custom_call.1} parent=5 // pred_check_branch
        %150 = sbr.rel (%p147) target = $region28
      $region27: #{tpu_custom_call.1} parent=5 // pred_region
        %s151 = ssub.s32 %s14, 1
        %s152 = sand.u32 %s41, 1
        %s153 = scalar_lea.sflag [#allocation3], %s152
        %s154 = sand.u32 %s41, 1
        %s155 = smul.addr %s154, 4
        %s156 = scalar_lea.vmem [#allocation2], %s155
        // Predicated region
        $region29: #{tpu_custom_call.1} parent=27 // pred_check
          %p157 = pneg %p54
        $region30: #{tpu_custom_call.1} parent=27 // pred_check_branch
          %159 = sbr.rel (%p157) target = $region32
        $region31: #{tpu_custom_call.1} parent=27 // pred_region
          %160 = dma.done %s153, 64
        $region32: #{tpu_custom_call.1} parent=27 // pred_fallthru
          _
        %s161 = sand.u32 %s41, 1
        %s162 = scalar_lea.sflag [#allocation3], %s161
        %s163 = sand.u32 %s41, 1
        %s164 = smul.addr %s163, 4
        %s165 = scalar_lea.vmem [#allocation2], %s164
        %p166 = pneg %p54
        %p167 = pneg %p51
        %p168 = pneg %p75
        %p169 = pneg %p72
        %p170 = pneg %p103
        %p171 = pneg %p100
        %s172 = sand.u32 %s90, 1
        %s173 = scalar_lea.sflag [#allocation4], %s172
        %s174 = sand.u32 %s90, 1
        %s175 = smul.addr %s174, 4
        %s176 = scalar_lea.vmem [#allocation5], %s175
        %v177 = vld [vmem:[%s156] sm:$0xf]
        %v178 = vld [vmem:[%s1] sm:$0xf]
        %vm179 = vcmask 1043456
        %v180 = vsel %vm179, %v177, 0.0
        %v181 = vrot.slane %v180, 4
        %v182 = vadd.f32 %v180, %v181
        %v183 = vrot.slane %v182, 2
        %v184 = vadd.f32 %v182, %v183
        %v185 = vrot.slane %v184, 1
        %v186 = vadd.f32 %v184, %v185
        %v187 = vrcp.pop 4.0
        %v188 = vmul.f32 %v186, %v187
        %v189 = vsub.f32 %v177, %v188
        %v190 = vmul.f32 %v189, %v189
        %v191 = vsel %vm179, %v190, 0.0
        %v192 = vrot.slane %v191, 4
        %v193 = vadd.f32 %v191, %v192
        %v194 = vrot.slane %v193, 2
        %v195 = vadd.f32 %v193, %v194
        %v196 = vrot.slane %v195, 1
        %v197 = vadd.f32 %v195, %v196
        %v198 = vmul.f32 %v197, %v187
        %v199 = vadd.f32 %v198, 1e-05
        %v200 = vrsqrt.pop %v199
        %v201 = vmul.f32 %v189, %v200
        %203 = vset.pattern.permute.xlu0 0
        %204 = vperm.xlu0 %203, %v178
        %v205 = vpop.permute.xlu0 %204
        %v207 = vmul.f32 %v201, %v205
        %208 = vst [vmem:[%s176] sm:$0xf] %v207
        %s209 = sand.u32 %s90, 1
        %s210 = scalar_lea.sflag [#allocation4], %s209
        %s211 = sand.u32 %s90, 1
        %s212 = smul.addr %s211, 4
        %s213 = scalar_lea.vmem [#allocation5], %s212
        // Predicated region
        $region33: #{tpu_custom_call.1} parent=27 // pred_check
          %p214 = pneg %p100
        $region34: #{tpu_custom_call.1} parent=27 // pred_check_branch
          %216 = sbr.rel (%p214) target = $region36
        $region35: #{tpu_custom_call.1} parent=27 // pred_region
          %s218 = ssub.s32 64, 64
          %219 = vsyncadd %s210, %s218
          %s220 = smul.addr %s23, 2
          %s221 = sadd.s32 %s24, %s220
          %s222 = smul.addr %s221, 64
          %s223 = scalar_lea.hbm %s2, %s222
          %s225 = sshll.u32 %s213, 4
          %s226 = int_to_ptr.vmem [resolvable:$true] %s225
          %228 = dma.vmem_to_hbm [thread:$0]  %s226, 64, %s223, %s210
        $region36: #{tpu_custom_call.1} parent=27 // pred_fallthru
          _
      $region28: #{tpu_custom_call.1} parent=5 // pred_fallthru
        _
      %p229 = scmp.le.s32.totalorder 2, %s14
      // Predicated region
      $region37: #{tpu_custom_call.1} parent=5 // pred_check
        %p230 = pneg %p229
      $region38: #{tpu_custom_call.1} parent=5 // pred_check_branch
        %232 = sbr.rel (%p230) target = $region40
      $region39: #{tpu_custom_call.1} parent=5 // pred_region
        %s233 = ssub.s32 %s14, 2
        // Predicated region
        $region41: #{tpu_custom_call.1} parent=39 // pred_check
          %p234 = pneg %p106
        $region42: #{tpu_custom_call.1} parent=39 // pred_check_branch
          %236 = sbr.rel (%p234) target = $region44
        $region43: #{tpu_custom_call.1} parent=39 // pred_region
          %s237 = sand.u32 %s91, 1
          %s238 = scalar_lea.sflag [#allocation4], %s237
          %s239 = sand.u32 %s91, 1
          %s240 = smul.addr %s239, 4
          %s241 = scalar_lea.vmem [#allocation5], %s240
          %242 = dma.done %s238, 64
        $region44: #{tpu_custom_call.1} parent=39 // pred_fallthru
          _
      $region40: #{tpu_custom_call.1} parent=5 // pred_fallthru
        _
    $region6: #{tpu_custom_call.1} parent=1 // loop_footer
      %s18 = sadd.s32 1, %s14
    $region7: #{tpu_custom_call.1} parent=1 // loop_footer_branch
      %13 = sbr.rel target = $region3
    $region8: #{tpu_custom_call.1} parent=1 // loop_exit
      _
    %243 = vsyncpa [#allocation3], 1
    %s244 = scalar_lea.sflag [#allocation3], 1
    %245 = vsyncpa %s244, 1
    %246 = vsyncpa [#allocation4], 1
    %s247 = scalar_lea.sflag [#allocation4], 1
    %248 = vsyncpa %s247, 1

</llo_original>
